<compile_context>
chip_gen: v7x
topology: tpu7x:2x2x1
jax: 0.10.0
libtpu: 0.0.40
codegen_flags: <defaults>
</compile_context>

<pallas_src>
import functools

import jax
import jax.numpy as jnp
from jax.experimental import pallas as pl
from jax.experimental.pallas import tpu as pltpu

_LANES = 128
_SUBLANES = 8


def _round_up(x, m):
    return ((x + m - 1) // m) * m


def _cdiv(a, b):
    return -(-a // b)


def _max_tile_rows_for_device():
    """Per-generation elementwise tile cap (rows of a (rows,128) f32 block).

    v5e : default scoped VMEM is 16 MiB -> 2048 rows (5 arrays x 2 buffers
          x 1 MiB = 10 MiB) and already >=85-90% of the 0.82 TB/s roofline.
    v6e : 2048 rows (10 MiB double-buffered) under the 32 MiB default.
    v7x : 4096 rows (20 MiB double-buffered, still under the 32 MiB default
          scoped VMEM; physical VMEM is 64 MiB) to amortize the ~0.35us/step
          overhead against 3.2 TB/s HBM.
    """
    try:
        kind = jax.devices()[0].device_kind.lower()
    except Exception:
        return 2048
    if "v7" in kind:
        return 4096
    return 2048


# ----------------------------------------------------------------------------
# Pallas kernels (all SI state lives in one fused (rows, 128) f32 buffer)
# ----------------------------------------------------------------------------
def _sgd_update_w_kernel(p_ref, w_ref, g_ref, lr_ref, p_out_ref, w_out_ref):
    """Fused optimizer step + SI path-integral accumulation.

    p_new = p - lr * grad
    W_new = W - grad * (p_new - p_old)   with p_old == p (pre-update value)
    """
    lr = lr_ref[0]
    p = p_ref[...]
    g = g_ref[...]
    p_new = p - lr * g
    p_out_ref[...] = p_new
    w_out_ref[...] = w_ref[...] - g * (p_new - p)


def _update_w_kernel(w_ref, g_ref, p_ref, pold_ref, w_out_ref):
    """PyTorch-parity:  W_new = W + (-grad * (p - p_old))."""
    w_out_ref[...] = w_ref[...] - g_ref[...] * (p_ref[...] - pold_ref[...])


def _update_omega_kernel(omega_ref, w_ref, p_ref, prev_ref, eps_ref, out_ref):
    """omega_new = omega + W / ((p - prev)^2 + epsilon)   (epsilon from SMEM)."""
    d = p_ref[...] - prev_ref[...]
    out_ref[...] = omega_ref[...] + w_ref[...] * pl.reciprocal(
        d * d + eps_ref[0], approx=False)


def _si_loss_kernel(omega_ref, p_ref, prev_ref, out_ref, acc_ref):
    """Partial sums of omega * (p - prev)^2.

    grid = (splits, row_blocks_per_split).  Each split (one per TensorCore on
    v7x via the 'parallel' leading axis) keeps a full-tile VMEM accumulator
    (pure VPU adds per step) and does a single cross-lane reduction +
    lane-dense broadcast store into its own (8,128) output block at the end.
    """
    i = pl.program_id(1)

    @pl.when(i == 0)
    def _():
        acc_ref[...] = jnp.zeros_like(acc_ref)

    d = p_ref[...] - prev_ref[...]
    acc_ref[...] += omega_ref[...] * d * d

    @pl.when(i == pl.num_programs(1) - 1)
    def _():
        out_ref[...] = jnp.broadcast_to(jnp.sum(acc_ref[...]), out_ref.shape)


# ----------------------------------------------------------------------------
# jitted pallas_call wrappers (donated state args => aliasing is truly in place)
# ----------------------------------------------------------------------------
_ELEMWISE_PARAMS = pltpu.CompilerParams(dimension_semantics=("parallel",))
_SMEM_SPEC = pl.BlockSpec(memory_space=pltpu.MemorySpace.SMEM)


def _row_specs(n, tile_rows):
    return [pl.BlockSpec((tile_rows, _LANES), lambda i: (i, 0)) for _ in range(n)]


@functools.partial(jax.jit, static_argnames=("tile_rows",), donate_argnums=(0, 1))
def _sgd_step_and_update_w(p, W, grad, lr, *, tile_rows):
    rows = p.shape[0]
    lr_arr = jnp.asarray(lr, jnp.float32).reshape(1)
    return pl.pallas_call(
        _sgd_update_w_kernel,
        out_shape=(jax.ShapeDtypeStruct((rows, _LANES), jnp.float32),
                   jax.ShapeDtypeStruct((rows, _LANES), jnp.float32)),
        grid=(rows // tile_rows,),
        in_specs=_row_specs(3, tile_rows) + [_SMEM_SPEC],
        out_specs=(pl.BlockSpec((tile_rows, _LANES), lambda i: (i, 0)),
                   pl.BlockSpec((tile_rows, _LANES), lambda i: (i, 0))),
        input_output_aliases={0: 0, 1: 1},     # p -> p_new, W -> W_new
        compiler_params=_ELEMWISE_PARAMS,
    )(p, W, grad, lr_arr)


@functools.partial(jax.jit, static_argnames=("tile_rows",), donate_argnums=(0,))
def _update_w(W, grad, p, p_old, *, tile_rows):
    rows = W.shape[0]
    return pl.pallas_call(
        _update_w_kernel,
        out_shape=jax.ShapeDtypeStruct((rows, _LANES), jnp.float32),
        grid=(rows // tile_rows,),
        in_specs=_row_specs(4, tile_rows),
        out_specs=pl.BlockSpec((tile_rows, _LANES), lambda i: (i, 0)),
        input_output_aliases={0: 0},           # W in place
        compiler_params=_ELEMWISE_PARAMS,
    )(W, grad, p, p_old)


@functools.partial(jax.jit, static_argnames=("tile_rows",), donate_argnums=(0,))
def _update_omega(omega, W, p, prev, epsilon, *, tile_rows):
    rows = omega.shape[0]
    eps_arr = jnp.asarray(epsilon, jnp.float32).reshape(1)
    return pl.pallas_call(
        _update_omega_kernel,
        out_shape=jax.ShapeDtypeStruct((rows, _LANES), jnp.float32),
        grid=(rows // tile_rows,),
        in_specs=_row_specs(4, tile_rows) + [_SMEM_SPEC],
        out_specs=pl.BlockSpec((tile_rows, _LANES), lambda i: (i, 0)),
        input_output_aliases={0: 0},           # omega in place
        compiler_params=_ELEMWISE_PARAMS,
    )(omega, W, p, prev, eps_arr)


@functools.partial(jax.jit, static_argnames=("tile_rows", "num_splits"))
def _si_loss(omega, p, prev, *, tile_rows, num_splits):
    rows = omega.shape[0]
    n_blocks = rows // tile_rows
    bpc = n_blocks // num_splits            # row blocks per split

    in_spec = pl.BlockSpec((tile_rows, _LANES), lambda c, i: (c * bpc + i, 0))
    partials = pl.pallas_call(
        _si_loss_kernel,
        out_shape=jax.ShapeDtypeStruct((num_splits * _SUBLANES, _LANES),
                                       jnp.float32),
        grid=(num_splits, bpc),
        in_specs=[in_spec] * 3,
        out_specs=pl.BlockSpec((_SUBLANES, _LANES), lambda c, i: (c, 0)),
        scratch_shapes=[pltpu.VMEM((tile_rows, _LANES), jnp.float32)],
        compiler_params=pltpu.CompilerParams(
            dimension_semantics=("parallel", "arbitrary")),
    )(omega, p, prev)
    # every element of split c's (8,128) block holds that split's partial sum
    return jnp.sum(partials.reshape(num_splits, _SUBLANES * _LANES)[:, 0])


@functools.partial(jax.jit,
                   static_argnames=("in_dim", "out_dim", "in_pad", "out_pad",
                                    "w_rows", "b_rows"))
def _linear_forward(x, p_blocked, *, in_dim, out_dim, in_pad, out_pad,
                    w_rows, b_rows):
    """y = x @ W.T + b, reading W/b directly from the fused blocked buffer."""
    batch = x.shape[0]
    b_pad = _round_up(max(batch, 1), _SUBLANES)
    x_p = jnp.zeros((b_pad, in_pad), jnp.float32).at[:batch, :in_dim].set(x)
    rows = p_blocked.shape[0]

    def kernel(x_ref, f_ref, o_ref):
        # weight region of the fused buffer is already the padded, transposed
        # (in_pad, out_pad) MXU operand; reshape is a no-op when out_pad == 128.
        w = f_ref[0:w_rows, :].reshape(in_pad, out_pad)
        b = f_ref[w_rows:w_rows + b_rows, :].reshape(1, out_pad)
        o_ref[...] = jnp.dot(x_ref[...], w,
                             preferred_element_type=jnp.float32) + b

    # TODO(synk): for large classifiers replace this single-block matmul with
    # an (M,N,K)-tiled grid + f32 VMEM accumulator (N/K tiles of 256 on
    # v6e/v7x, 128 on v5e) and optionally bf16 operands.
    y = pl.pallas_call(
        kernel,
        out_shape=jax.ShapeDtypeStruct((b_pad, out_pad), jnp.float32),
        in_specs=[pl.BlockSpec((b_pad, in_pad), lambda: (0, 0)),
                  pl.BlockSpec((rows, _LANES), lambda: (0, 0))],
        out_specs=pl.BlockSpec((b_pad, out_pad), lambda: (0, 0)),
    )(x_p, p_blocked)
    return y[:batch, :out_dim]


# ----------------------------------------------------------------------------
# ContinualLearner (JAX/Pallas version)
# ----------------------------------------------------------------------------
class ContinualLearner:
    """JAX/Pallas port of the SI continual-learning mixin.

    All SI-controlled parameters live permanently in ONE fused, zero-padded,
    lane-dense (rows, 128) float32 buffer:

        rows [0, w_rows)            : weight, transposed + padded (in_pad, out_pad)
        rows [w_rows, w_rows+b_rows): bias, padded to out_pad lanes
        remaining rows              : zero padding up to a tile multiple

    The forward matmul reads weight/bias straight out of this buffer, and each
    SI op is a single memory-bound pallas_call over the whole buffer with the
    SI-state operand donated (true in-place aliasing).  The zero-padded region
    stays exactly zero through every update, so it contributes 0 to si_loss.
    """

    def __init__(self, key, in_dim=32, out_dim=16):
        # attributes mirrored from the PyTorch module
        self.si_c = 0
        self.epsilon = 0.1
        self.distill_temp = 2.0
        self.previous_model = None
        self.optimizer = None
        self.optim_list = []
        self.si_param_names = ["classifier__fc__weight", "classifier__fc__bias"]

        self.in_dim, self.out_dim = in_dim, out_dim
        self.in_pad = _round_up(in_dim, _LANES)     # K padded to 128 for the MXU
        self.out_pad = _round_up(out_dim, _LANES)
        self._w_rows = self.in_pad * self.out_pad // _LANES
        self._b_rows = self.out_pad // _LANES
        rows_used = self._w_rows + self._b_rows
        rows_min = _round_up(rows_used, _SUBLANES)

        # near-even tile split: padding waste bounded by 8 * n_tiles rows
        max_tile = _max_tile_rows_for_device()
        n_tiles = _cdiv(rows_min, max_tile)
        self._tile_rows = _round_up(_cdiv(rows_min, n_tiles), _SUBLANES)
        self._rows = self._tile_rows * n_tiles
        # split the si_loss reduction 2-ways when possible (one half per TC on v7x)
        self._loss_splits = 2 if (n_tiles >= 2 and n_tiles % 2 == 0) else 1

        # deterministic synthetic classifier params, packed ONCE at init
        k1, k2 = jax.random.split(key)
        weight = jax.random.normal(k1, (out_dim, in_dim), jnp.float32) * 0.1
        bias = jax.random.normal(k2, (out_dim,), jnp.float32) * 0.1
        self._p_blocked = self.pack({"classifier__fc__weight": weight,
                                     "classifier__fc__bias": bias})

        # SI buffers (same fused layout); None until registered / updated
        self._prev_blocked = None    # {n}_SI_prev_task
        self._omega_blocked = None   # {n}_SI_omega

    # ------------------------------------------------------------------ glue
    def pack(self, tensors_by_name):
        """Pack {weight (out,in), bias (out,)} into the fused blocked layout.

        Used once at init (and for externally produced grads in the demo);
        in a full JAX training loop grads would be produced directly in this
        layout by differentiating w.r.t. the fused buffer.
        """
        w = tensors_by_name["classifier__fc__weight"].astype(jnp.float32)
        b = tensors_by_name["classifier__fc__bias"].astype(jnp.float32)
        w_blk = jnp.zeros((self.in_pad, self.out_pad), jnp.float32)
        w_blk = w_blk.at[:self.in_dim, :self.out_dim].set(w.T)
        b_pad = jnp.zeros((self.out_pad,), jnp.float32).at[:self.out_dim].set(b)
        buf = jnp.zeros((self._rows, _LANES), jnp.float32)
        buf = buf.at[:self._w_rows].set(w_blk.reshape(self._w_rows, _LANES))
        buf = buf.at[self._w_rows:self._w_rows + self._b_rows].set(
            b_pad.reshape(self._b_rows, _LANES))
        return buf

    def get_param(self, name):
        """Natural-shape view of a parameter (inspection / export only)."""
        if name == "classifier__fc__weight":
            w = self._p_blocked[:self._w_rows].reshape(self.in_pad, self.out_pad)
            return w[:self.in_dim, :self.out_dim].T
        if name == "classifier__fc__bias":
            b = self._p_blocked[
                self._w_rows:self._w_rows + self._b_rows].reshape(-1)
            return b[:self.out_dim]
        raise KeyError(name)

    def _zeros_blocked(self):
        return jnp.zeros((self._rows, _LANES), jnp.float32)

    def params_blocked_copy(self):
        # real copy: required because SI updates DONATE the live param buffer
        return jnp.copy(self._p_blocked)

    # --------------------------------------------------------------- forward
    def forward(self, x):
        # TODO(synk): forward() is abstract in the PyTorch module; this is the
        # minimal concrete linear classifier used to exercise the SI kernels.
        return _linear_forward(
            x.astype(jnp.float32), self._p_blocked,
            in_dim=self.in_dim, out_dim=self.out_dim,
            in_pad=self.in_pad, out_pad=self.out_pad,
            w_rows=self._w_rows, b_rows=self._b_rows)

    # ---------------------------------------------------------- SI machinery
    def register_start_values(self):
        """Register starting values of all SI params ({n}_SI_prev_task)."""
        self._prev_blocked = self.params_blocked_copy()

    def initiate_W(self):
        """Before each new episode/task, initiate new W (and p_old) buffers."""
        return self._zeros_blocked(), self.params_blocked_copy()

    def sgd_step_and_update_W(self, W, grads_blocked, lr):
        """Fused optimizer step + SI W accumulation (preferred fast path).

        p <- p - lr*grad ;  W <- W - grad*(p_new - p_old) with p_old = pre-update p.
        Both p and W are updated truly in place (donated + aliased); p_old is
        tracked implicitly (it always equals the live p after each step).
        """
        p_new, W_new = _sgd_step_and_update_w(
            self._p_blocked, W, grads_blocked, jnp.float32(lr),
            tile_rows=self._tile_rows)
        self._p_blocked = p_new
        return W_new

    def update_W(self, W, p_old, grads_blocked):
        """PyTorch-parity path: W += -grad * (p - p_old); p_old <- p.clone()."""
        W_new = _update_w(W, grads_blocked, self._p_blocked, p_old,
                          tile_rows=self._tile_rows)
        return W_new, self.params_blocked_copy()

    def update_omega(self, W, epsilon):
        """omega += W / ((p - prev)^2 + epsilon); prev <- p.clone()."""
        omega = (self._omega_blocked if self._omega_blocked is not None
                 else self._zeros_blocked())
        self._omega_blocked = _update_omega(
            omega, W, self._p_blocked, self._prev_blocked,
            jnp.float32(epsilon), tile_rows=self._tile_rows)
        self._prev_blocked = self.params_blocked_copy()

    def si_loss(self):
        """sum(omega * (p - prev)^2) over all SI-controlled parameters."""
        if self._prev_blocked is None or self._omega_blocked is None:
            return jnp.float32(0.0)
        return _si_loss(self._omega_blocked, self._p_blocked,
                        self._prev_blocked, tile_rows=self._tile_rows,
                        num_splits=self._loss_splits)


# ----------------------------------------------------------------------------
# Demo
# ----------------------------------------------------------------------------
if __name__ == "__main__":
    key = jax.random.PRNGKey(0)
    (k_model, k_x, kg1w, kg1b, kg2w, kg2b, kg3w, kg3b) = jax.random.split(key, 8)

    B, IN, OUT = 2, 32, 16
    model = ContinualLearner(k_model, in_dim=IN, out_dim=OUT)
    x = jax.random.normal(k_x, (B, IN), jnp.float32)

    # forward pass (Pallas linear kernel reading the fused blocked params)
    y = model.forward(x)

    def make_grads(kw, kb, scale=0.01):
        return model.pack({
            "classifier__fc__weight":
                jax.random.normal(kw, (OUT, IN), jnp.float32) * scale,
            "classifier__fc__bias":
                jax.random.normal(kb, (OUT,), jnp.float32) * scale,
        })

    # ---- task 1 ------------------------------------------------------------
    model.register_start_values()
    W, p_old = model.initiate_W()

    # training steps: fused SGD + SI W-update (in-place / donated)
    W = model.sgd_step_and_update_W(W, make_grads(kg1w, kg1b), lr=0.1)
    W = model.sgd_step_and_update_W(W, make_grads(kg2w, kg2b), lr=0.1)

    # PyTorch-parity update path, exercised once (uses explicit p_old buffer)
    W, p_old = model.update_W(W, p_old, make_grads(kg2w, kg2b))

    # end of task 1: consolidate into omega, reset prev_task
    model.update_omega(W, model.epsilon)

    # ---- task 2: parameters move again, so the SI penalty is non-zero ------
    W2, _ = model.initiate_W()
    W2 = model.sgd_step_and_update_W(W2, make_grads(kg3w, kg3b), lr=0.2)

    loss = model.si_loss()
    y2 = model.forward(x)

    jax.block_until_ready((y, y2, loss, W2))
    assert y.shape == (B, OUT) and y2.shape == (B, OUT)
    assert loss.shape == () and bool(jnp.isfinite(loss))
    print("KERNEL_OK")
</pallas_src>

<mosaic_0001>
module attributes {stable_mosaic.version = 11 : i64} {
  func.func @kernel(%arg0: memref<8x128xf32, #tpu.memory_space<vmem>>, %arg1: memref<136x128xf32, #tpu.memory_space<vmem>>, %arg2: memref<8x128xf32, #tpu.memory_space<vmem>>) attributes {dimension_semantics = [], scalar_prefetch = 0 : i64, scratch_operands = 0 : i64, tpu.core_type = #tpu.core_type<tc>} {
    %c0 = arith.constant 0 : index
    %c0_0 = arith.constant 0 : index
    %0 = vector.load %arg1[%c0, %c0_0] : memref<136x128xf32, #tpu.memory_space<vmem>>, vector<128x128xf32>
    %c128 = arith.constant 128 : index
    %c0_1 = arith.constant 0 : index
    %1 = vector.load %arg1[%c128, %c0_1] : memref<136x128xf32, #tpu.memory_space<vmem>>, vector<1x128xf32>
    %c0_2 = arith.constant 0 : index
    %c0_3 = arith.constant 0 : index
    %2 = vector.load %arg0[%c0_2, %c0_3] : memref<8x128xf32, #tpu.memory_space<vmem>>, vector<8x128xf32>
    %cst = arith.constant dense<0.000000e+00> : vector<8x128xf32>
    %3 = tpu.matmul %2, %0, %cst {dimension_numbers = #tpu.dot_dimension_numbers<[1], [0], [0], [1], [0, 0, 1, 1], [], []>} : vector<8x128xf32>, vector<128x128xf32>, vector<8x128xf32> -> vector<8x128xf32>
    %4 = vector.broadcast %1 : vector<1x128xf32> to vector<8x128xf32>
    %5 = arith.addf %3, %4 : vector<8x128xf32>
    %c0_4 = arith.constant 0 : index
    %c0_5 = arith.constant 0 : index
    %6 = vector.load %arg2[%c0_4, %c0_5] : memref<8x128xf32, #tpu.memory_space<vmem>>, vector<8x128xf32>
    tpu.vector_store %arg2[%c0_4, %c0_5], %5 {strides = array<i32>} : memref<8x128xf32, #tpu.memory_space<vmem>>, vector<8x128xf32>,
    return
  }
}

</mosaic_0001>

<llo_original>
// kernel: _linear_forward.1
$region0: #{_linear_forward.1}
  #allocation0 [shape = 'u32[]', space=smem, size = 0x4, offset = 0x4, fixed_abs, tag = 'smem constant byte address 0x4 - core index']
  #allocation1 [shape = 'u32[144,128]{1,0:T(1,128)}', space=vmem, size = 0x12000, scoped, tag = 'internal scratch']
  %s0 = inlined_call_operand.vmem [shape: f32[8,128], index: 0, kind: input, shape index: {}]
  %s1 = inlined_call_operand.hbm [shape: f32[136,128], index: 1, kind: input, shape index: {}]
  %s2 = inlined_call_operand.vmem [shape: f32[8,128], index: 2, kind: output, shape index: {}]
  %s3 = sld [smem:[#allocation0]]
  $region22: #{_linear_forward.1} parent=0
    _
  %s5 = ssub.s32 1, %s3
  %s6 = scalar_select 0, %s5, %s3
  $region1: #{_linear_forward.1} parent=0
    #allocation2 [shape = 'u8[69632]{0}', space=vmem, size = 0x11000, scoped, tag = 'input window, operand 1, single buffered']
    #allocation3 [shape = 's32[1]{0}', space=sflag, size = 0x4, scoped, tag = 'scoped memory for _linear_forward.1']
    %7 = vsyncpa [#allocation3], 0
    // Predicated region
    $region2: #{_linear_forward.1} parent=1 // pred_check
      _
    $region3: #{_linear_forward.1} parent=1 // pred_check_branch
      %9 = sbr.rel (0) target = $region5
    $region4: #{_linear_forward.1} parent=1 // pred_region
      _
    $region5: #{_linear_forward.1} parent=1 // pred_fallthru
      _
    // Predicated region
    $region6: #{_linear_forward.1} parent=1 // pred_check
      _
    $region7: #{_linear_forward.1} parent=1 // pred_check_branch
      %11 = sbr.rel (0) target = $region9
    $region8: #{_linear_forward.1} parent=1 // pred_region
      %s13 = ssub.s32 2176, 2176
      %14 = vsyncadd [#allocation3], %s13
      %s15 = sshll.u32 [#allocation2], 4
      %s16 = int_to_ptr.vmem [resolvable:$true] %s15
      %21 = dma.hbm_to_vmem [thread:$0]  %s1, 2176, %s16, [#allocation3], 128, 128, 8
    $region9: #{_linear_forward.1} parent=1 // pred_fallthru
      _
    // Predicated region
    $region10: #{_linear_forward.1} parent=1 // pred_check
      _
    $region11: #{_linear_forward.1} parent=1 // pred_check_branch
      %23 = sbr.rel (0) target = $region13
    $region12: #{_linear_forward.1} parent=1 // pred_region
      %24 = dma.done [#allocation3], 2176
    $region13: #{_linear_forward.1} parent=1 // pred_fallthru
      _
    %v25 = vld [vmem:[#allocation2] sm:$0xff]
    %v26 = vld [vmem:[#allocation2 + $0x8] sm:$0xff]
    %v27 = vld [vmem:[#allocation2 + $0x10] sm:$0xff]
    %v28 = vld [vmem:[#allocation2 + $0x18] sm:$0xff]
    %v29 = vld [vmem:[#allocation2 + $0x20] sm:$0xff]
    %v30 = vld [vmem:[#allocation2 + $0x28] sm:$0xff]
    %v31 = vld [vmem:[#allocation2 + $0x30] sm:$0xff]
    %v32 = vld [vmem:[#allocation2 + $0x38] sm:$0xff]
    %v33 = vld [vmem:[#allocation2 + $0x40] sm:$0xff]
    %v34 = vld [vmem:[#allocation2 + $0x48] sm:$0xff]
    %v35 = vld [vmem:[#allocation2 + $0x50] sm:$0xff]
    %v36 = vld [vmem:[#allocation2 + $0x58] sm:$0xff]
    %v37 = vld [vmem:[#allocation2 + $0x60] sm:$0xff]
    %v38 = vld [vmem:[#allocation2 + $0x68] sm:$0xff]
    %v39 = vld [vmem:[#allocation2 + $0x70] sm:$0xff]
    %v40 = vld [vmem:[#allocation2 + $0x78] sm:$0xff]
    %v41 = vld [vmem:[#allocation2 + $0x80] sm:$0x1]
    %v42 = vld [vmem:[%s0] sm:$0xff]
    %v43 = vlaneseq
    %v44 = vshrl.u32 %v43, 7
    %v45 = vsub.s32 0, %v44
    %v46 = vrot.slane %v41, %v45
    %47 = vmatprep.subr.mxu0 0.0
    %48 = vmatpush1.msra.mxu0 %v25
    %49 = vmatprep.subr.mxu0 0.0
    %50 = vmatpush1.msra.mxu0 %v26
    %51 = vmatprep.subr.mxu0 0.0
    %52 = vmatpush1.msra.mxu0 %v27
    %53 = vmatprep.subr.mxu0 0.0
    %54 = vmatpush1.msra.mxu0 %v28
    %55 = vmatprep.subr.mxu0 0.0
    %56 = vmatpush1.msra.mxu0 %v29
    %57 = vmatprep.subr.mxu0 0.0
    %58 = vmatpush1.msra.mxu0 %v30
    %59 = vmatprep.subr.mxu0 0.0
    %60 = vmatpush1.msra.mxu0 %v31
    %61 = vmatprep.subr.mxu0 0.0
    %62 = vmatpush1.msra.mxu0 %v32
    %63 = vmatprep.subr.mxu0 0.0
    %64 = vmatpush1.msra.mxu0 %v33
    %65 = vmatprep.subr.mxu0 0.0
    %66 = vmatpush1.msra.mxu0 %v34
    %67 = vmatprep.subr.mxu0 0.0
    %68 = vmatpush1.msra.mxu0 %v35
    %69 = vmatprep.subr.mxu0 0.0
    %70 = vmatpush1.msra.mxu0 %v36
    %71 = vmatprep.subr.mxu0 0.0
    %72 = vmatpush1.msra.mxu0 %v37
    %73 = vmatprep.subr.mxu0 0.0
    %74 = vmatpush1.msra.mxu0 %v38
    %75 = vmatprep.subr.mxu0 0.0
    %76 = vmatpush1.msra.mxu0 %v39
    %77 = vmatprep.subr.mxu0 0.0
    %78 = vmatpush1.msra.mxu0 %v40
    %79 = vmatprep.subr.mxu0 0.0
    %80 = vmatpush1.msra.mxu0 0.0
    %81 = vmatprep.subr.mxu0 0.0
    %82 = vmatpush1.msra.mxu0 0.0
    %83 = vmatprep.subr.mxu0 0.0
    %84 = vmatpush1.msra.mxu0 0.0
    %85 = vmatprep.subr.mxu0 0.0
    %86 = vmatpush1.msra.mxu0 0.0
    %87 = vmatprep.subr.mxu0 0.0
    %88 = vmatpush1.msra.mxu0 0.0
    %89 = vmatprep.subr.mxu0 0.0
    %90 = vmatpush1.msra.mxu0 0.0
    %91 = vmatprep.subr.mxu0 0.0
    %92 = vmatpush1.msra.mxu0 0.0
    %93 = vmatprep.subr.mxu0 0.0
    %94 = vmatpush1.msra.mxu0 0.0
    %95 = vmatprep.subr.mxu0 0.0
    %96 = vmatpush1.msra.mxu0 0.0
    %97 = vmatprep.subr.mxu0 0.0
    %98 = vmatpush1.msra.mxu0 0.0
    %99 = vmatprep.subr.mxu0 0.0
    %100 = vmatpush1.msra.mxu0 0.0
    %101 = vmatprep.subr.mxu0 0.0
    %102 = vmatpush1.msra.mxu0 0.0
    %103 = vmatprep.subr.mxu0 0.0
    %104 = vmatpush1.msra.mxu0 0.0
    %105 = vmatprep.subr.mxu0 0.0
    %106 = vmatpush1.msra.mxu0 0.0
    %107 = vmatprep.subr.mxu0 0.0
    %108 = vmatpush1.msra.mxu0 0.0
    %109 = vmatprep.subr.mxu0 0.0
    %110 = vmatpush1.msra.mxu0 0.0
    %111 = vmatprep.mubr.f32.mxu0 0.0
    %112 = vmatmul.mubr.f32.gmra.mrb[0].mxu0 %v42
    %v113 = vpop.f32.mrb[0].mxu0
    %v114 = vadd.f32 %v46, %v113
    %v115 = vpop.f32.mrb[0].mxu0
    %116 = vdwg.mxu0
    %117 = vst [vmem:[%s2] sm:$0xff] %v114
    // Predicated region
    $region14: #{_linear_forward.1} parent=1 // pred_check
      _
    $region15: #{_linear_forward.1} parent=1 // pred_check_branch
      %119 = sbr.rel (0) target = $region17
    $region16: #{_linear_forward.1} parent=1 // pred_region
      _
    $region17: #{_linear_forward.1} parent=1 // pred_fallthru
      _
    // Predicated region
    $region18: #{_linear_forward.1} parent=1 // pred_check
      _
    $region19: #{_linear_forward.1} parent=1 // pred_check_branch
      %121 = sbr.rel (0) target = $region21
    $region20: #{_linear_forward.1} parent=1 // pred_region
      _
    $region21: #{_linear_forward.1} parent=1 // pred_fallthru
      _
    %122 = vsyncpa [#allocation3], 1

</llo_original>
